<compile_context>
chip_gen: v7x
topology: tpu7x:2x2x1
jax: 0.10.0
libtpu: 0.0.40
codegen_flags: <defaults>
</compile_context>

<pallas_src>
import functools

import jax
import jax.numpy as jnp
from jax.experimental import pallas as pl
from jax.experimental.pallas import tpu as pltpu


def _cdiv(a, b):
    return -(-a // b)


def _round_up(n, m):
    return _cdiv(n, m) * m


def prepare_character_lstm_params(params):
    """One-time parameter prep (hoisted out of the per-call forward path).

    Folds the embedding table into the input->hidden weights:
        gates_fwd[w] = emb[first_char[w]] @ wih_f + b_f
                     = (emb @ wih_f)[first_char[w]] + b_f
    and packs both directions block-diagonally so the kernel's embedding gather
    is a single lane-dense one-hot MXU matmul.  whh_* are dead (zero-state
    shortcut) and are not needed here.
    """
    emb = params["embedding"].astype(jnp.float32)
    vocab, _ = emb.shape
    h4 = params["wih_f"].shape[1]                    # 4 * H2
    v_pad = _round_up(vocab, 64)                     # 2*v_pad is a multiple of 128 lanes

    g_f = emb @ params["wih_f"].astype(jnp.float32)  # (vocab, 4*H2), exact f32 fold
    g_b = emb @ params["wih_b"].astype(jnp.float32)
    g_cat = jnp.zeros((2 * v_pad, 2 * h4), jnp.float32)
    g_cat = g_cat.at[:vocab, :h4].set(g_f)
    g_cat = g_cat.at[v_pad:v_pad + vocab, h4:].set(g_b)
    b_cat = jnp.concatenate([params["b_f"], params["b_b"]], axis=1).astype(jnp.float32)

    return {"g_cat": g_cat.astype(jnp.bfloat16),     # bf16 MXU operand, VMEM-resident
            "b_cat": b_cat}                          # (1, 8*H2) f32


def _char_lstm_cell_kernel(first_ref, last_ref, g_ref, b_ref, out_ref):
    """Zero-state LSTM cell step for both directions of a word tile.

    gates = onehot([first | last]) @ G + b, with G = emb @ wih folded at prep
    time, so the embedding gather rides the same MXU matmul (no HBM x_cat).
    """
    tile, h = out_ref.shape
    h2 = h // 2
    v2 = g_ref.shape[0]                                    # 2 * padded vocab (lane multiple of 128)

    # Concatenated one-hot for both directions (lane-dense).  `last_ref` is
    # pre-shifted by V_pad in the wrapper so it selects the backward block.
    lane = jax.lax.broadcasted_iota(jnp.int32, (tile, v2), 1)
    hit = jnp.logical_or(lane == first_ref[...], lane == last_ref[...])
    onehot = jnp.where(hit, 1.0, 0.0).astype(jnp.bfloat16)

    # One MXU call gathers both embeddings and applies both directions'
    # input->hidden weights (block-diagonal G).  f32 bias + accumulation.
    gates = (jnp.dot(onehot, g_ref[...], preferred_element_type=jnp.float32)
             + b_ref[...])                                 # (tile, 8*h2) f32

    # Dense transcendentals over the full 128-lane gate slab (one sigmoid pass,
    # one tanh pass on the EUP); 16-lane slices only for the cheap VPU combines.
    # PyTorch gate order per direction: (i, f, g, o); c0 == 0 so f is unused.
    sig = jax.nn.sigmoid(gates)
    th = jnp.tanh(gates)
    c_f = sig[:, 0 * h2:1 * h2] * th[:, 2 * h2:3 * h2]     # i_f * tanh(g_f)
    c_b = sig[:, 4 * h2:5 * h2] * th[:, 6 * h2:7 * h2]     # i_b * tanh(g_b)

    # Direct slice stores (no lane concat shuffle).
    out_ref[:, :h2] = sig[:, 3 * h2:4 * h2] * jnp.tanh(c_f)   # o_f * tanh(c_f)
    out_ref[:, h2:] = sig[:, 7 * h2:8 * h2] * jnp.tanh(c_b)   # o_b * tanh(c_b)


def _choose_word_tiling(n_words, word_tile):
    """Balanced word-axis tiling.

    * big tiles by default (amortize the ~0.35 us/grid-step overhead),
    * tiles rebalanced so the last one isn't mostly padding,
    * at least 2 grid steps when there is enough work, so the "parallel" grid
      axis can shard across both v7x TensorCores (v5e/v6e: single TC, harmless).
    """
    n_tiles = _cdiv(n_words, word_tile)
    if n_tiles < 2 and n_words >= 16:
        n_tiles = 2
    tile = _round_up(_cdiv(n_words, n_tiles), 8)
    return tile, _round_up(n_words, tile)


def character_lstm_forward(prepared, batch_character_indexes_seq, batch_word_lengths,
                           batch_sentence_lengths, *, padded_length, word_tile=1024):
    """JAX/Pallas equivalent of CharacterLSTM.forward.

    `prepared` comes from `prepare_character_lstm_params` (call once, reuse).
    `batch_sentence_lengths` is accepted for API parity; the PyTorch forward
    never uses it.  Requires 1 <= batch_word_lengths <= T (as does
    pack_padded_sequence); lengths are clamped defensively.
    """
    del batch_sentence_lengths                       # unused, same as the reference module
    T, W = batch_character_indexes_seq.shape
    g_cat, b_cat = prepared["g_cat"], prepared["b_cat"]
    v2, g8 = g_cat.shape                             # (2*V_pad, 8*H2)
    h2 = g8 // 8
    H = 2 * h2
    v_pad = v2 // 2

    if W % padded_length != 0:
        raise ValueError(
            f"num_words={W} must equal num_sentences * padded_length ({padded_length})")

    # Only two characters per word are ever consumed (zero-state shortcut):
    # first char (forward dir, t = 0) and last valid char (backward dir,
    # packed reverse starts at t = len-1).  Ship just their indices.
    seq = batch_character_indexes_seq.astype(jnp.int32)
    lens = jnp.clip(batch_word_lengths.astype(jnp.int32), 1, T)
    first_idx = seq[0].reshape(W, 1)
    last_idx = (seq[lens - 1, jnp.arange(W)] + v_pad).reshape(W, 1)  # pre-shifted into bwd block

    tile, w_pad = _choose_word_tiling(W, word_tile)
    if w_pad != W:
        pad = ((0, w_pad - W), (0, 0))
        first_idx = jnp.pad(first_idx, pad)          # padded rows -> finite garbage, sliced off
        last_idx = jnp.pad(last_idx, pad)

    # VMEM per grid step (double-buffered): 2*(2*tile*512B idx + tile*H*4B out)
    # + ~64 KiB resident tables + ~tile*512B gate temps  ->  ~3 MiB at tile=2048;
    # a 32 MiB scoped limit is safe on v5e/v6e (128 MiB) and v7x (64 MiB).
    out = pl.pallas_call(
        _char_lstm_cell_kernel,
        out_shape=jax.ShapeDtypeStruct((w_pad, H), jnp.float32),
        grid_spec=pltpu.PrefetchScalarGridSpec(
            num_scalar_prefetch=0,
            grid=(w_pad // tile,),
            in_specs=[
                pl.BlockSpec((tile, 1), lambda i: (i, 0)),   # first-char index
                pl.BlockSpec((tile, 1), lambda i: (i, 0)),   # last-char index (+V_pad)
                pl.BlockSpec((v2, g8), lambda i: (0, 0)),    # fused gate table (VMEM-resident)
                pl.BlockSpec((1, g8), lambda i: (0, 0)),     # fused bias (VMEM-resident)
            ],
            out_specs=pl.BlockSpec((tile, H), lambda i: (i, 0)),
        ),
        compiler_params=pltpu.CompilerParams(
            dimension_semantics=("parallel",),               # megacore shard on v7x
            vmem_limit_bytes=32 * 1024 * 1024,
        ),
    )(first_idx, last_idx, g_cat, b_cat)

    out = out[:W].reshape(W // padded_length, padded_length, H)
    return jnp.transpose(out, (1, 0, 2))             # (padded_length, num_sentences, H)


def _ref_full_forward(params, seq, lengths, padded_length):
    """Pure-JAX f32 reference: the *full* packed bidirectional LSTM recurrence,
    exactly as the PyTorch module computes it (masked per-timestep updates),
    then the same output selection.  Validates the algebraic shortcut."""
    T, W = seq.shape
    H2 = params["wih_f"].shape[1] // 4
    H = 2 * H2
    embs = jnp.take(params["embedding"], seq, axis=0)            # (T, W, E)
    lens = lengths.astype(jnp.int32)

    def cell(x, h, c, wih, whh, b):
        gates = x @ wih + h @ whh + b
        i = jax.nn.sigmoid(gates[:, 0:H2])
        f = jax.nn.sigmoid(gates[:, H2:2 * H2])
        g = jnp.tanh(gates[:, 2 * H2:3 * H2])
        o = jax.nn.sigmoid(gates[:, 3 * H2:4 * H2])
        c_new = f * c + i * g
        return o * jnp.tanh(c_new), c_new

    # forward direction: t = 0 .. T-1, freeze state once t >= length
    h = jnp.zeros((W, H2), jnp.float32); c = jnp.zeros((W, H2), jnp.float32)
    outs_f = []
    for t in range(T):
        m = (t < lens)[:, None].astype(jnp.float32)
        hn, cn = cell(embs[t], h, c, params["wih_f"], params["whh_f"], params["b_f"])
        h = m * hn + (1.0 - m) * h
        c = m * cn + (1.0 - m) * c
        outs_f.append(h)

    # backward direction: t = T-1 .. 0, a word's state starts at t == length-1
    hb = jnp.zeros((W, H2), jnp.float32); cb = jnp.zeros((W, H2), jnp.float32)
    outs_b = [None] * T
    for t in range(T - 1, -1, -1):
        m = (t < lens)[:, None].astype(jnp.float32)
        hn, cn = cell(embs[t], hb, cb, params["wih_b"], params["whh_b"], params["b_b"])
        hb = m * hn + (1.0 - m) * hb
        cb = m * cn + (1.0 - m) * cb
        outs_b[t] = hb

    out_fwd = outs_f[0]                                          # fwd hidden at t == 0
    outs_b = jnp.stack(outs_b)                                   # (T, W, H2)
    out_bwd = outs_b[lens - 1, jnp.arange(W)]                    # bwd hidden at t == len-1
    out = jnp.concatenate([out_fwd, out_bwd], axis=1)
    return jnp.transpose(out.reshape(-1, padded_length, H), (1, 0, 2))


if __name__ == "__main__":
    key = jax.random.PRNGKey(0)

    VOCAB = 64          # len(const.CHARACTER2INDEX), synthetic
    E = 32              # embedding_dim
    HIDDEN = 32         # hidden_dim
    H2 = HIDDEN // 2
    T = 8               # max characters per word
    B_SENT = 2
    PADDED_LEN = 4      # padded sentence length (words per sentence)
    W = B_SENT * PADDED_LEN

    keys = jax.random.split(key, 8)
    k_init = 1.0 / (H2 ** 0.5)
    params = {
        # trunc_normal_(std=0.01) stand-in; padding row not zeroed (the PyTorch
        # init overwrites it anyway, and padding_idx only affects gradients).
        "embedding": 0.01 * jax.random.normal(keys[0], (VOCAB, E), jnp.float32),
        # PyTorch stores weight_ih_l0 as (4*H2, E); we keep its transpose (E, 4*H2).
        "wih_f": jax.random.uniform(keys[1], (E, 4 * H2), jnp.float32, -k_init, k_init),
        "whh_f": jax.random.uniform(keys[2], (H2, 4 * H2), jnp.float32, -k_init, k_init),
        "b_f": jax.random.uniform(keys[3], (1, 4 * H2), jnp.float32, -k_init, k_init),   # b_ih + b_hh folded
        "wih_b": jax.random.uniform(keys[4], (E, 4 * H2), jnp.float32, -k_init, k_init),
        "whh_b": jax.random.uniform(keys[5], (H2, 4 * H2), jnp.float32, -k_init, k_init),
        "b_b": jax.random.uniform(keys[6], (1, 4 * H2), jnp.float32, -k_init, k_init),
    }

    seq = jax.random.randint(keys[7], (T, W), 2, VOCAB, dtype=jnp.int32)
    word_lengths = jnp.array([3, 8, 1, 5, 7, 2, 4, 6], dtype=jnp.int32)   # per word, all in [1, T]
    sentence_lengths = jnp.array([4, 3], dtype=jnp.int32)                 # unused by forward

    prepared = prepare_character_lstm_params(params)   # one-time prep, hoisted out of forward
    fwd_fn = jax.jit(functools.partial(character_lstm_forward, padded_length=PADDED_LEN))
    out = jax.block_until_ready(fwd_fn(prepared, seq, word_lengths, sentence_lengths))

    ref = _ref_full_forward(params, seq, word_lengths, PADDED_LEN)
    assert out.shape == (PADDED_LEN, B_SENT, HIDDEN), out.shape
    # kernel uses a bf16 folded gate table (f32 accumulation); reference is full f32
    assert jnp.allclose(out, ref, atol=5e-3, rtol=5e-3), "mismatch vs full-recurrence reference"
    print("KERNEL_OK")
</pallas_src>

<mosaic_0001>
module attributes {stable_mosaic.version = 11 : i64} {
  func.func @_char_lstm_cell_kernel(%arg0: i32, %arg1: memref<8x1xi32, #tpu.memory_space<vmem>>, %arg2: memref<8x1xi32, #tpu.memory_space<vmem>>, %arg3: memref<128x128xbf16, #tpu.memory_space<vmem>>, %arg4: memref<1x128xf32, #tpu.memory_space<vmem>>, %arg5: memref<8x32xf32, #tpu.memory_space<vmem>>) attributes {dimension_semantics = [#tpu.dimension_semantics<parallel>], iteration_bounds = array<i64: 1>, scalar_prefetch = 0 : i64, scratch_operands = 0 : i64, tpu.core_type = #tpu.core_type<tc>, window_params = [{transform_indices = @transform_0, window_bounds = array<i64: 8, 1>}, {transform_indices = @transform_1, window_bounds = array<i64: 8, 1>}, {pipeline_mode = #tpu.pipeline_mode<synchronous>, transform_indices = @transform_2, window_bounds = array<i64: 128, 128>}, {pipeline_mode = #tpu.pipeline_mode<synchronous>, transform_indices = @transform_3, window_bounds = array<i64: 1, 128>}, {transform_indices = @transform_4, window_bounds = array<i64: 8, 32>}]} {
    %0 = tpu.iota {dimensions = array<i32: 1>} : vector<8x128xi32>
    %c0 = arith.constant 0 : index
    %c0_0 = arith.constant 0 : index
    %1 = vector.load %arg1[%c0, %c0_0] : memref<8x1xi32, #tpu.memory_space<vmem>>, vector<8x1xi32>
    %2 = vector.broadcast %1 : vector<8x1xi32> to vector<8x128xi32>
    %3 = arith.cmpi eq, %0, %2 : vector<8x128xi32>
    %c0_1 = arith.constant 0 : index
    %c0_2 = arith.constant 0 : index
    %4 = vector.load %arg2[%c0_1, %c0_2] : memref<8x1xi32, #tpu.memory_space<vmem>>, vector<8x1xi32>
    %5 = vector.broadcast %4 : vector<8x1xi32> to vector<8x128xi32>
    %6 = arith.cmpi eq, %0, %5 : vector<8x128xi32>
    %7 = arith.ori %3, %6 : vector<8x128xi1>
    %cst = arith.constant 1.000000e+00 : f32
    %cst_3 = arith.constant 0.000000e+00 : f32
    %8 = vector.broadcast %cst : f32 to vector<8x128xf32>
    %9 = vector.broadcast %cst_3 : f32 to vector<8x128xf32>
    %10 = arith.select %7, %8, %9 : vector<8x128xi1>, vector<8x128xf32>
    %11 = arith.truncf %10 : vector<8x128xf32> to vector<8x128xbf16>
    %c0_4 = arith.constant 0 : index
    %c0_5 = arith.constant 0 : index
    %12 = vector.load %arg3[%c0_4, %c0_5] : memref<128x128xbf16, #tpu.memory_space<vmem>>, vector<128x128xbf16>
    %cst_6 = arith.constant dense<0.000000e+00> : vector<8x128xf32>
    %13 = tpu.matmul %11, %12, %cst_6 {dimension_numbers = #tpu.dot_dimension_numbers<[1], [0], [0], [1], [0, 0, 1, 1], [], []>} : vector<8x128xbf16>, vector<128x128xbf16>, vector<8x128xf32> -> vector<8x128xf32>
    %c0_7 = arith.constant 0 : index
    %c0_8 = arith.constant 0 : index
    %14 = vector.load %arg4[%c0_7, %c0_8] : memref<1x128xf32, #tpu.memory_space<vmem>>, vector<1x128xf32>
    %15 = vector.broadcast %14 : vector<1x128xf32> to vector<8x128xf32>
    %16 = arith.addf %13, %15 : vector<8x128xf32>
    %17 = arith.negf %16 : vector<8x128xf32>
    %18 = math.exp %17 : vector<8x128xf32>
    %cst_9 = arith.constant 1.000000e+00 : f32
    %19 = vector.broadcast %cst_9 : f32 to vector<8x128xf32>
    %20 = arith.addf %19, %18 : vector<8x128xf32>
    %21 = arith.divf %19, %20 : vector<8x128xf32>
    %22 = math.tanh %16 : vector<8x128xf32>
    %23 = vector.extract_strided_slice %21 {offsets = [0, 0], sizes = [8, 16], strides = [1, 1]} : vector<8x128xf32> to vector<8x16xf32>
    %24 = vector.extract_strided_slice %22 {offsets = [0, 32], sizes = [8, 16], strides = [1, 1]} : vector<8x128xf32> to vector<8x16xf32>
    %25 = arith.mulf %23, %24 : vector<8x16xf32>
    %26 = vector.extract_strided_slice %21 {offsets = [0, 64], sizes = [8, 16], strides = [1, 1]} : vector<8x128xf32> to vector<8x16xf32>
    %27 = vector.extract_strided_slice %22 {offsets = [0, 96], sizes = [8, 16], strides = [1, 1]} : vector<8x128xf32> to vector<8x16xf32>
    %28 = arith.mulf %26, %27 : vector<8x16xf32>
    %29 = vector.extract_strided_slice %21 {offsets = [0, 48], sizes = [8, 16], strides = [1, 1]} : vector<8x128xf32> to vector<8x16xf32>
    %30 = math.tanh %25 : vector<8x16xf32>
    %31 = arith.mulf %29, %30 : vector<8x16xf32>
    %c0_10 = arith.constant 0 : index
    %c0_11 = arith.constant 0 : index
    %32 = vector.load %arg5[%c0_10, %c0_11] : memref<8x32xf32, #tpu.memory_space<vmem>>, vector<8x16xf32>
    tpu.vector_store %arg5[%c0_10, %c0_11], %31 {strides = array<i32>} : memref<8x32xf32, #tpu.memory_space<vmem>>, vector<8x16xf32>,
    %33 = vector.extract_strided_slice %21 {offsets = [0, 112], sizes = [8, 16], strides = [1, 1]} : vector<8x128xf32> to vector<8x16xf32>
    %34 = math.tanh %28 : vector<8x16xf32>
    %35 = arith.mulf %33, %34 : vector<8x16xf32>
    %c0_12 = arith.constant 0 : index
    %c16 = arith.constant 16 : index
    %36 = vector.load %arg5[%c0_12, %c16] : memref<8x32xf32, #tpu.memory_space<vmem>>, vector<8x16xf32>
    tpu.vector_store %arg5[%c0_12, %c16], %35 {strides = array<i32>} : memref<8x32xf32, #tpu.memory_space<vmem>>, vector<8x16xf32>,
    return
  }
  func.func @transform_0(%arg0: i32) -> (i32, i32) {
    %c0_i32 = arith.constant 0 : i32
    %c0_i32_0 = arith.constant 0 : i32
    return %arg0, %c0_i32 : i32, i32
  }
  func.func @transform_1(%arg0: i32) -> (i32, i32) {
    %c0_i32 = arith.constant 0 : i32
    %c0_i32_0 = arith.constant 0 : i32
    return %arg0, %c0_i32 : i32, i32
  }
  func.func @transform_2(%arg0: i32) -> (i32, i32) {
    %c0_i32 = arith.constant 0 : i32
    %c0_i32_0 = arith.constant 0 : i32
    %c0_i32_1 = arith.constant 0 : i32
    return %c0_i32, %c0_i32_0 : i32, i32
  }
  func.func @transform_3(%arg0: i32) -> (i32, i32) {
    %c0_i32 = arith.constant 0 : i32
    %c0_i32_0 = arith.constant 0 : i32
    %c0_i32_1 = arith.constant 0 : i32
    return %c0_i32, %c0_i32_0 : i32, i32
  }
  func.func @transform_4(%arg0: i32) -> (i32, i32) {
    %c0_i32 = arith.constant 0 : i32
    %c0_i32_0 = arith.constant 0 : i32
    return %arg0, %c0_i32 : i32, i32
  }
}

</mosaic_0001>

<llo_original>
// kernel: character_lstm_forward.1
$region0: #{character_lstm_forward.1}
  #allocation0 [shape = 'u32[]', space=smem, size = 0x4, offset = 0x4, fixed_abs, tag = 'smem constant byte address 0x4 - core index']
  #allocation1 [shape = 'u32[144,128]{1,0:T(1,128)}', space=vmem, size = 0x12000, scoped, tag = 'internal scratch']
  %s0 = inlined_call_operand.vmem [shape: s32[8,1], index: 0, kind: input, shape index: {}]
  %s1 = inlined_call_operand.vmem [shape: s32[8,1], index: 1, kind: input, shape index: {}]
  %s2 = inlined_call_operand.vmem [shape: bf16[128,128], index: 2, kind: input, shape index: {}]
  %s3 = inlined_call_operand.vmem [shape: f32[1,128], index: 3, kind: input, shape index: {}]
  %s4 = inlined_call_operand.vmem [shape: f32[8,32], index: 4, kind: output, shape index: {}]
  %s5 = sld [smem:[#allocation0]]
  $region26: #{character_lstm_forward.1} parent=0
    _
  %s7 = ssub.s32 1, %s5
  %s8 = scalar_select 0, %s7, %s5
  // Predicated region
  $region2: #{character_lstm_forward.1} parent=0 // pred_check
    _
  $region3: #{character_lstm_forward.1} parent=0 // pred_check_branch
    %10 = sbr.rel (0) target = $region5
  $region4: #{character_lstm_forward.1} parent=0 // pred_region
    _
  $region5: #{character_lstm_forward.1} parent=0 // pred_fallthru
    _
  // Predicated region
  $region6: #{character_lstm_forward.1} parent=0 // pred_check
    _
  $region7: #{character_lstm_forward.1} parent=0 // pred_check_branch
    %12 = sbr.rel (0) target = $region9
  $region8: #{character_lstm_forward.1} parent=0 // pred_region
    _
  $region9: #{character_lstm_forward.1} parent=0 // pred_fallthru
    _
  // Predicated region
  $region10: #{character_lstm_forward.1} parent=0 // pred_check
    _
  $region11: #{character_lstm_forward.1} parent=0 // pred_check_branch
    %14 = sbr.rel (0) target = $region13
  $region12: #{character_lstm_forward.1} parent=0 // pred_region
    _
  $region13: #{character_lstm_forward.1} parent=0 // pred_fallthru
    _
  // Predicated region
  $region14: #{character_lstm_forward.1} parent=0 // pred_check
    _
  $region15: #{character_lstm_forward.1} parent=0 // pred_check_branch
    %16 = sbr.rel (0) target = $region17
  $region16: #{character_lstm_forward.1} parent=0 // pred_region
    _
  $region17: #{character_lstm_forward.1} parent=0 // pred_fallthru
    _
  %v18 = vlaneseq
  %v19 = vand.u32 %v18, 127
  %v20 = vld [vmem:[%s0] sm:$0xff]
  %21 = vset.pattern.permute.xlu0 0
  %22 = vperm.xlu0 %21, %v20
  %v23 = vpop.permute.xlu0 %22
  %vm24 = vcmp.eq.s32.totalorder %v19, %v23
  %v25 = vld [vmem:[%s1] sm:$0xff]
  %26 = vset.pattern.permute.xlu0 0
  %27 = vperm.xlu0 %26, %v25
  %v28 = vpop.permute.xlu0 %27
  %vm29 = vcmp.eq.s32.totalorder %v19, %v28
  %vm30 = vmor %vm24, %vm29
  %v31 = vsel %vm30, 1.0, 0.0
  %v32 = vpack.c.bf16 %v31, %v31
  %v33 = vld [vmem:[%s2] sm:$0xf]
  %v34 = vld [vmem:[%s2 + $0x4] sm:$0xf]
  %v35 = vld [vmem:[%s2 + $0x8] sm:$0xf]
  %v36 = vld [vmem:[%s2 + $0xc] sm:$0xf]
  %v37 = vld [vmem:[%s2 + $0x10] sm:$0xf]
  %v38 = vld [vmem:[%s2 + $0x14] sm:$0xf]
  %v39 = vld [vmem:[%s2 + $0x18] sm:$0xf]
  %v40 = vld [vmem:[%s2 + $0x1c] sm:$0xf]
  %v41 = vld [vmem:[%s2 + $0x20] sm:$0xf]
  %v42 = vld [vmem:[%s2 + $0x24] sm:$0xf]
  %v43 = vld [vmem:[%s2 + $0x28] sm:$0xf]
  %v44 = vld [vmem:[%s2 + $0x2c] sm:$0xf]
  %v45 = vld [vmem:[%s2 + $0x30] sm:$0xf]
  %v46 = vld [vmem:[%s2 + $0x34] sm:$0xf]
  %v47 = vld [vmem:[%s2 + $0x38] sm:$0xf]
  %v48 = vld [vmem:[%s2 + $0x3c] sm:$0xf]
  %v49 = vld [vmem:[%s3] sm:$0x1]
  %v51 = vlaneseq
  %v52 = vshrl.u32 %v51, 7
  %v53 = vsub.s32 0, %v52
  %v54 = vrot.slane %v49, %v53
  %v72 = vunpack.c.l.b16 %v33
  %v73 = vunpack.c.l.b16 %v34
  %v74 = vunpack.c.l.b16 %v35
  %v75 = vunpack.c.l.b16 %v36
  %v76 = vunpack.c.l.b16 %v37
  %v77 = vunpack.c.l.b16 %v38
  %v78 = vunpack.c.l.b16 %v39
  %v79 = vunpack.c.l.b16 %v40
  %v80 = vunpack.c.l.b16 %v41
  %v81 = vunpack.c.l.b16 %v42
  %v82 = vunpack.c.l.b16 %v43
  %v83 = vunpack.c.l.b16 %v44
  %v84 = vunpack.c.l.b16 %v45
  %v85 = vunpack.c.l.b16 %v46
  %v86 = vunpack.c.l.b16 %v47
  %v87 = vunpack.c.l.b16 %v48
  %v88 = vpack.c.b16 %v73, %v72
  %v89 = vpack.c.b16 %v75, %v74
  %v90 = vpack.c.b16 %v77, %v76
  %v91 = vpack.c.b16 %v79, %v78
  %v92 = vpack.c.b16 %v81, %v80
  %v93 = vpack.c.b16 %v83, %v82
  %v94 = vpack.c.b16 %v85, %v84
  %v95 = vpack.c.b16 %v87, %v86
  %104 = vmatprep.subr.bf16.mxu0 0
  %105 = vmatpush1.bf16.msra.mxu0 %v88
  %106 = vmatprep.subr.bf16.mxu0 0
  %107 = vmatpush1.bf16.msra.mxu0 %v89
  %108 = vmatprep.subr.bf16.mxu0 0
  %109 = vmatpush1.bf16.msra.mxu0 %v90
  %110 = vmatprep.subr.bf16.mxu0 0
  %111 = vmatpush1.bf16.msra.mxu0 %v91
  %112 = vmatprep.subr.bf16.mxu0 0
  %113 = vmatpush1.bf16.msra.mxu0 %v92
  %114 = vmatprep.subr.bf16.mxu0 0
  %115 = vmatpush1.bf16.msra.mxu0 %v93
  %116 = vmatprep.subr.bf16.mxu0 0
  %117 = vmatpush1.bf16.msra.mxu0 %v94
  %118 = vmatprep.subr.bf16.mxu0 0
  %119 = vmatpush1.bf16.msra.mxu0 %v95
  %120 = vmatprep.subr.bf16.mxu0 0
  %121 = vmatpush1.bf16.msra.mxu0 0
  %122 = vmatprep.subr.bf16.mxu0 0
  %123 = vmatpush1.bf16.msra.mxu0 0
  %124 = vmatprep.subr.bf16.mxu0 0
  %125 = vmatpush1.bf16.msra.mxu0 0
  %126 = vmatprep.subr.bf16.mxu0 0
  %127 = vmatpush1.bf16.msra.mxu0 0
  %128 = vmatprep.subr.bf16.mxu0 0
  %129 = vmatpush1.bf16.msra.mxu0 0
  %130 = vmatprep.subr.bf16.mxu0 0
  %131 = vmatpush1.bf16.msra.mxu0 0
  %132 = vmatprep.subr.bf16.mxu0 0
  %133 = vmatpush1.bf16.msra.mxu0 0
  %134 = vmatprep.subr.bf16.mxu0 0
  %135 = vmatpush1.bf16.msra.mxu0 0
  %136 = vmatprep.mubr.bf16.mxu0 0
  %137 = vmatmul.mubr.bf16.gmra.mrb[0].mxu0 %v32
  %v138 = vpop.f32.mrb[0].mxu0
  %v139 = vadd.f32 %v54, %v138
  %v140 = vpop.f32.mrb[0].mxu0
  %v141 = vpop.f32.mrb[0].mxu0
  %v142 = vpop.f32.mrb[0].mxu0
  %143 = vdwg.mxu0
  %v144 = vxor.u32 %v139, 2147483648
  %v145 = vmul.f32 %v144, 1.442695
  %v146 = vpow.pop %v145
  %v147 = vadd.f32 %v146, 1.0
  %v148 = vrcp.pop %v147
  %v149 = vmul.f32 1.0, %v148
  %v150 = vtanh.pop %v139
  %152 = vrot.lane.b32.xlu0 %v150, 96
  %v153 = vpop.permute.xlu0 %152
  %v155 = vmul.f32 %v149, %v153
  %v156 = vtanh.pop %v155
  %158 = vrot.lane.b32.xlu0 %v156, 48
  %v159 = vpop.permute.xlu0 %158
  %v161 = vmul.f32 %v149, %v159
  %163 = vrot.lane.b32.xlu0 %v161, 80
  %v164 = vpop.permute.xlu0 %163
  %vm166 = vcmask 130048
  %167 = vst.msk [vmem:[%s4] sm:$0xff] %vm166, %v164
  %168 = vrot.lane.b32.xlu0 %v161, 32
  %v169 = vpop.permute.xlu0 %168
  %vm171 = vcmask 261248
  %172 = vst.msk [vmem:[%s4] sm:$0xff] %vm171, %v169
  // Predicated region
  $region18: #{character_lstm_forward.1} parent=0 // pred_check
    _
  $region19: #{character_lstm_forward.1} parent=0 // pred_check_branch
    %174 = sbr.rel (0) target = $region21
  $region20: #{character_lstm_forward.1} parent=0 // pred_region
    _
  $region21: #{character_lstm_forward.1} parent=0 // pred_fallthru
    _
  // Predicated region
  $region22: #{character_lstm_forward.1} parent=0 // pred_check
    _
  $region23: #{character_lstm_forward.1} parent=0 // pred_check_branch
    %176 = sbr.rel (0) target = $region25
  $region24: #{character_lstm_forward.1} parent=0 // pred_region
    _
  $region25: #{character_lstm_forward.1} parent=0 // pred_fallthru
    _

</llo_original>
